<compile_context>
chip_gen: v7x
topology: tpu7x:2x2x1
jax: 0.10.0
libtpu: 0.0.40
codegen_flags: <defaults>
</compile_context>

<pallas_src>
import functools
import math
from typing import NamedTuple, Optional

import jax
import jax.numpy as jnp
from jax.experimental import pallas as pl
from jax.experimental.pallas import tpu as pltpu


def _round_up(a: int, b: int) -> int:
    return (a + b - 1) // b * b


def _largest_div_tile(total: int, unit: int, cap: int) -> int:
    """Largest multiple of `unit` that divides `total` and is <= cap (>= unit)."""
    best = unit
    d = unit
    hi = min(total, max(cap, unit))
    while d <= hi:
        if total % d == 0:
            best = d
        d += unit
    return best


@functools.lru_cache(maxsize=None)
def _pipeline_mode_supported() -> bool:
    """True iff this Pallas build accepts BlockSpec(pipeline_mode=pl.Buffered(1))."""
    try:
        pl.BlockSpec((8, 128), lambda i, k: (0, 0), pipeline_mode=pl.Buffered(1))
        return True
    except Exception:
        return False


@functools.lru_cache(maxsize=None)
def _device_kind() -> str:
    try:
        return jax.devices()[0].device_kind.lower()
    except Exception:
        return ""


def _vmem_capacity_bytes() -> int:
    try:
        return int(pltpu.get_tpu_info().vmem_capacity_bytes)
    except Exception:
        return 64 << 20


# ----------------------------------------------------------------------------
# Kernel
# ----------------------------------------------------------------------------
def _downsample_kernel(x_ref, w_ref, c_ref, *rest, eps, nk, has_seg, bf16_sig,
                       compute_dtype):
    """Grid step (i, k): accumulate X_ik @ W_k; at k == nk-1 run the epilogue
    (bias -> SiLU -> LayerNorm) and store the lane-dense output row block."""
    if has_seg:
        s_ref, *rest = rest
    else:
        s_ref = None
    o_ref, *rest = rest
    acc_ref = rest[0] if nk > 1 else None

    # Conv-as-matmul on the MXU: cast the X tile to bf16 in-kernel (no host-side
    # pass over x), accumulate in f32.
    part = jnp.dot(x_ref[...].astype(compute_dtype), w_ref[...],
                   preferred_element_type=jnp.float32)

    def _epilogue(y):
        c = c_ref[...]                 # (8, rD): row0 bias, row1 gamma, row2 beta
        y = y + c[0:1, :]
        if bf16_sig:                   # bf16 EUP (v6e/v7x): ~2x sigmoid throughput
            sig = jax.nn.sigmoid(y.astype(jnp.bfloat16)).astype(jnp.float32)
        else:
            sig = jax.nn.sigmoid(y)
        y = y * sig                    # SiLU
        if s_ref is not None:
            # Per-D-segment LayerNorm stats via a small block-diagonal averaging
            # matmul (bf16 operands, f32 accumulation): lane-aligned, no
            # in-kernel reshape/relayout, no multi-pass f32 MXU work.
            s = s_ref[...]
            mean = jnp.dot(y.astype(s.dtype), s, preferred_element_type=jnp.float32)
            centered = y - mean
            var = jnp.dot((centered * centered).astype(s.dtype), s,
                          preferred_element_type=jnp.float32)
        else:
            mean = jnp.mean(y, axis=-1, keepdims=True)
            centered = y - mean
            var = jnp.mean(centered * centered, axis=-1, keepdims=True)
        y = centered * jax.lax.rsqrt(var + eps)
        o_ref[...] = (y * c[1:2, :] + c[2:3, :]).astype(o_ref.dtype)

    if nk > 1:
        k = pl.program_id(1)

        @pl.when(k == 0)
        def _():
            acc_ref[...] = jnp.zeros_like(acc_ref)

        acc_ref[...] += part

        @pl.when(k == nk - 1)
        def _():
            _epilogue(acc_ref[...])
    else:
        _epilogue(part)


# ----------------------------------------------------------------------------
# Parameter folding (done once, outside the hot path)
# ----------------------------------------------------------------------------
class DownsampleParams(NamedTuple):
    w: jax.Array                 # (r*K*D, r*D) block-diag folded conv weight (compute dtype)
    consts: jax.Array            # (8, r*D) f32: row0 conv bias, row1 LN gamma, row2 LN beta
    seg: Optional[jax.Array]     # (r*D, r*D) block-diag averaging matrix (None if r == 1)
    r: int
    K: int
    D: int


def prepare_params(conv_w, conv_b, ln_gamma, ln_beta, *, sampling_rate,
                   compute_dtype=jnp.bfloat16):
    """Fold the Conv1d weight into a matmul operand ONCE, outside the hot path."""
    D = conv_w.shape[0]
    K = sampling_rate
    KD = K * D
    # Row-fold factor so the kernel output's last dim (r*D) is a multiple of 128
    # (lane-dense, unmasked stores); r == 1 when D is already a multiple of 128.
    r = 128 // math.gcd(D, 128)
    if r > 16:
        r = 1   # pathological D (not a multiple of 8): folding would blow up; keep unfolded

    # Wf[k*D + c, o] = conv_w[o, c, k]
    wf = jnp.transpose(conv_w.astype(jnp.float32), (2, 1, 0)).reshape(KD, D)
    if r > 1:
        wf = jnp.kron(jnp.eye(r, dtype=jnp.float32), wf)               # (r*KD, r*D)
        seg = jnp.kron(jnp.eye(r, dtype=jnp.float32),
                       jnp.full((D, D), 1.0 / D, dtype=jnp.float32))
        seg = seg.astype(compute_dtype)    # bf16 stat matmuls (f32 accumulation in-kernel)
    else:
        seg = None

    def tile(v):
        return jnp.tile(v.astype(jnp.float32).reshape(-1), r)

    consts = jnp.zeros((8, r * D), jnp.float32)
    consts = (consts.at[0].set(tile(conv_b))
                    .at[1].set(tile(ln_gamma))
                    .at[2].set(tile(ln_beta)))

    return DownsampleParams(w=wf.astype(compute_dtype), consts=consts, seg=seg,
                            r=r, K=K, D=D)


# ----------------------------------------------------------------------------
# Wrapper
# ----------------------------------------------------------------------------
def downsampling_projection(x, params: DownsampleParams, *, eps=1e-12, tm=None,
                            out_dtype=None, bf16_sigmoid=None, min_k_blocks=1):
    """x: (B, L, D). Returns (B, L//K, D) = LayerNorm(SiLU(Conv1d_{stride=K}(x)))."""
    B, L, D = x.shape
    assert D == params.D
    K, r = params.K, params.r
    T = L // K                         # Conv1d with no padding drops any tail < K
    out_dtype = x.dtype if out_dtype is None else out_dtype
    if T == 0:
        return jnp.zeros((B, 0, D), out_dtype)

    M = B * T
    KD = K * D
    rKD, rD = r * KD, r * D
    cdt = params.w.dtype
    xbytes = jnp.dtype(x.dtype).itemsize
    cbytes = jnp.dtype(cdt).itemsize
    obytes = jnp.dtype(out_dtype).itemsize
    sbytes = (0 if params.seg is None
              else params.seg.size * jnp.dtype(params.seg.dtype).itemsize)
    w_bytes = params.w.size * cbytes

    # --- VMEM budget (per TPU generation) ------------------------------------
    vmem_cap = _vmem_capacity_bytes()                        # 128 MiB v5e/v6e, 64 MiB v7x
    vmem_limit = min(max(vmem_cap - (16 << 20), 24 << 20), 112 << 20)
    budget = vmem_limit - (4 << 20)                          # Mosaic internal scratch headroom

    if tm is None:
        tm = 1024 if vmem_cap >= (96 << 20) else 512         # don't carry 1024-row tiles to v7x
    if bf16_sigmoid is None:
        kind = _device_kind()
        bf16_sigmoid = ("v6" in kind) or ("v7" in kind)      # v5e has no bf16 EUP/VPU

    # --- build the matmul operand: row-major reshapes are free; no host cast --
    x2d = x[:, :T * K, :].reshape(M, KD)
    M_p = _round_up(M, r)
    if M_p != M:
        # Rare corner case (M not a multiple of the fold factor r): zero-pad a
        # few rows so the fold reshape is legal.  Only host copy of x.
        x2d = jnp.pad(x2d, ((0, M_p - M), (0, 0)))
    M_r = M_p // r
    xf = x2d.reshape(M_r, rKD)         # free reshape; dtype left as-is (cast in-kernel)

    stream_ok = (rKD % 128 == 0)

    def _run(use_b1):
        cbuf = 1 if use_b1 else 2

        # Contraction tiling: stream the folded weight in (tk, rD) slices when a
        # resident copy would eat too much VMEM (mainly v7x's 64 MiB).
        if stream_ok and (min_k_blocks > 1 or cbuf * w_bytes > budget // 3):
            cap_tk = max(128, min((budget // 6) // max(rD * cbytes, 1),
                                  rKD // max(min_k_blocks, 1)))
            tk = _largest_div_tile(rKD, 128, cap_tk)
        else:
            tk = rKD
        nk = rKD // tk

        # Row tile: largest multiple of 16 folded rows that fits the VMEM budget.
        tm_r = max(1, tm // r)
        if tm_r < M_r:
            tm_r = max(16, (tm_r // 16) * 16)
        if tm_r >= M_r:
            tm_r = M_r                 # full-extent block (any size allowed)

        def vmem_use(t):
            use = 2 * t * tk * xbytes                            # X tiles (double-buffered)
            use += 2 * t * rD * obytes                           # output tiles
            use += (cbuf if nk == 1 else 2) * tk * rD * cbytes   # folded weight
            use += cbuf * (8 * rD * 4 + sbytes)                  # consts + stats matrix
            use += 4 * t * rD * 4                                # f32 y/centered/sq/stats
            if nk > 1:
                use += t * rD * 4                                # f32 accumulator scratch
            return use

        while tm_r > 16 and vmem_use(tm_r) > budget:
            new = max(16, ((tm_r // 2) // 16) * 16)
            if new == tm_r:
                break
            tm_r = new

        nm = pl.cdiv(M_r, tm_r)

        const_kw = {"pipeline_mode": pl.Buffered(1)} if use_b1 else {}
        w_kw = const_kw if nk == 1 else {}
        # TODO(synk): if a profile shows exposed DMA between row blocks in the
        # HBM-bound small-KD regime, sweep pipeline_mode=pl.Buffered(3) on the X
        # spec (costs one extra X tile of VMEM; re-check the budget on v7x).
        in_specs = [
            pl.BlockSpec((tm_r, tk), lambda i, k: (i, k)),            # X row block
            pl.BlockSpec((tk, rD), lambda i, k: (k, 0), **w_kw),      # folded weight
            pl.BlockSpec((8, rD), lambda i, k: (0, 0), **const_kw),   # bias/gamma/beta
        ]
        inputs = [xf, params.w, params.consts]
        if params.seg is not None:
            in_specs.append(pl.BlockSpec((rD, rD), lambda i, k: (0, 0), **const_kw))
            inputs.append(params.seg)

        kernel = functools.partial(
            _downsample_kernel, eps=eps, nk=nk, has_seg=params.seg is not None,
            bf16_sig=bf16_sigmoid, compute_dtype=cdt)

        flops = 2 * M_r * rKD * rD
        if params.seg is not None:
            flops += 4 * M_r * rD * rD          # two block-diag stat matmuls
        cost = pl.CostEstimate(
            flops=int(flops),
            transcendentals=int(2 * M_r * rD),  # sigmoid + rsqrt per output element
            bytes_accessed=int(M_r * rKD * xbytes + M_r * rD * obytes
                               + (1 if nk == 1 else nm) * w_bytes
                               + 8 * rD * 4 + sbytes))

        scratch = [pltpu.VMEM((tm_r, rD), jnp.float32)] if nk > 1 else []

        return pl.pallas_call(
            kernel,
            out_shape=jax.ShapeDtypeStruct((M_r, rD), out_dtype),
            grid_spec=pltpu.PrefetchScalarGridSpec(
                num_scalar_prefetch=0,
                grid=(nm, nk),
                in_specs=in_specs,
                out_specs=pl.BlockSpec((tm_r, rD), lambda i, k: (i, 0)),
                scratch_shapes=scratch),
            compiler_params=pltpu.CompilerParams(
                dimension_semantics=("parallel", "arbitrary"),
                vmem_limit_bytes=int(vmem_limit)),
            cost_estimate=cost,
        )(*inputs)

    use_b1 = _pipeline_mode_supported()
    try:
        out2d = _run(use_b1)
    except Exception:
        if not use_b1:
            raise
        # pl.Buffered(1) rejected at lowering on this backend: retry once with
        # default double-buffered constants (tiling re-derived under that
        # accounting).  A genuine failure re-raises from this second attempt.
        out2d = _run(False)

    return out2d.reshape(M_p, D)[:M].reshape(B, T, D)


# ----------------------------------------------------------------------------
# Pure-JAX reference (mirrors the PyTorch forward) + self-test
# ----------------------------------------------------------------------------
def _reference(x, conv_w, conv_b, ln_gamma, ln_beta, *, sampling_rate, eps=1e-12):
    B, L, D = x.shape
    K = sampling_rate
    T = L // K
    xb = x[:, :T * K, :].reshape(B, T, K, D)
    y = jnp.einsum("btkc,ock->bto", xb, conv_w) + conv_b
    y = y * jax.nn.sigmoid(y)                      # SiLU
    mean = jnp.mean(y, axis=-1, keepdims=True)
    var = jnp.mean((y - mean) ** 2, axis=-1, keepdims=True)
    y = (y - mean) * jax.lax.rsqrt(var + eps)
    return y * ln_gamma + ln_beta


if __name__ == "__main__":
    # TODO(synk): grouped/dilated conv (lt_conv_groups>1, lt_conv_dilation>1) and
    # the rms_norm=True variant are non-default configs and are not folded here.

    def _check(B, L, D, K, **kw):
        kx, kww, kb = jax.random.split(jax.random.PRNGKey(0), 3)
        x = jax.random.normal(kx, (B, L, D), dtype=jnp.float32)
        # Shapes per nn.Conv1d(D, D, K, stride=K) / nn.LayerNorm(D).
        conv_w = jax.random.normal(kww, (D, D, K), dtype=jnp.float32) * 0.05
        conv_b = jax.random.normal(kb, (D,), dtype=jnp.float32) * 0.05
        ln_gamma = jnp.ones((D,), dtype=jnp.float32)
        ln_beta = jnp.zeros((D,), dtype=jnp.float32)

        params = prepare_params(conv_w, conv_b, ln_gamma, ln_beta, sampling_rate=K)
        out = jax.block_until_ready(
            downsampling_projection(x, params, eps=1e-12, **kw))
        ref = _reference(x, conv_w, conv_b, ln_gamma, ln_beta,
                         sampling_rate=K, eps=1e-12)
        assert out.shape == (B, L // K, D), (out.shape, (B, L // K, D))
        # bf16 matmul operands (f32 accumulation) -> loosened tolerance vs f32 ref.
        assert jnp.allclose(out, ref, atol=5e-2, rtol=5e-2), (
            float(jnp.max(jnp.abs(out - ref))))

    # Primary small config from the module (batch=2, seq=16, hidden=32, rate=4):
    # D < 128 -> folded (r=4) lane-dense path, resident weight, single block.
    _check(2, 16, 32, 4)
    # Ragged everything: L not a multiple of K, M not a multiple of r, several
    # grid steps with a partial last row block (small tm forces multiple steps).
    _check(2, 294, 32, 4, tm=64)
    # D multiple of 128 (r == 1, plain LayerNorm reductions) with the streamed
    # contraction / f32-accumulator path (nk > 1) forced on.
    _check(2, 64, 256, 2, min_k_blocks=2)

    print("KERNEL_OK")
</pallas_src>

<mosaic_0001>
module attributes {stable_mosaic.version = 11 : i64} {
  func.func @_downsample_kernel(%arg0: i32, %arg1: i32, %arg2: memref<2x512xf32, #tpu.memory_space<vmem>>, %arg3: memref<512x128xbf16, #tpu.memory_space<vmem>>, %arg4: memref<8x128xf32, #tpu.memory_space<vmem>>, %arg5: memref<128x128xbf16, #tpu.memory_space<vmem>>, %arg6: memref<2x128xf32, #tpu.memory_space<vmem>>) attributes {dimension_semantics = [#tpu.dimension_semantics<parallel>, #tpu.dimension_semantics<arbitrary>], iteration_bounds = array<i64: 1, 1>, scalar_prefetch = 0 : i64, scratch_operands = 0 : i64, tpu.core_type = #tpu.core_type<tc>, window_params = [{transform_indices = @transform_0, window_bounds = array<i64: 2, 512>}, {pipeline_mode = #tpu.pipeline_mode<synchronous>, transform_indices = @transform_1, window_bounds = array<i64: 512, 128>}, {pipeline_mode = #tpu.pipeline_mode<synchronous>, transform_indices = @transform_2, window_bounds = array<i64: 8, 128>}, {pipeline_mode = #tpu.pipeline_mode<synchronous>, transform_indices = @transform_3, window_bounds = array<i64: 128, 128>}, {transform_indices = @transform_4, window_bounds = array<i64: 2, 128>}]} {
    %c0 = arith.constant 0 : index
    %c0_0 = arith.constant 0 : index
    %0 = vector.load %arg2[%c0, %c0_0] : memref<2x512xf32, #tpu.memory_space<vmem>>, vector<2x512xf32>
    %1 = arith.truncf %0 : vector<2x512xf32> to vector<2x512xbf16>
    %c0_1 = arith.constant 0 : index
    %c0_2 = arith.constant 0 : index
    %2 = vector.load %arg3[%c0_1, %c0_2] : memref<512x128xbf16, #tpu.memory_space<vmem>>, vector<512x128xbf16>
    %cst = arith.constant dense<0.000000e+00> : vector<2x128xf32>
    %3 = tpu.matmul %1, %2, %cst {dimension_numbers = #tpu.dot_dimension_numbers<[1], [0], [0], [1], [0, 0, 1, 1], [], []>} : vector<2x512xbf16>, vector<512x128xbf16>, vector<2x128xf32> -> vector<2x128xf32>
    %c0_3 = arith.constant 0 : index
    %c0_4 = arith.constant 0 : index
    %4 = vector.load %arg4[%c0_3, %c0_4] : memref<8x128xf32, #tpu.memory_space<vmem>>, vector<8x128xf32>
    %5 = vector.extract_strided_slice %4 {offsets = [0, 0], sizes = [1, 128], strides = [1, 1]} : vector<8x128xf32> to vector<1x128xf32>
    %6 = vector.broadcast %5 : vector<1x128xf32> to vector<2x128xf32>
    %7 = arith.addf %3, %6 : vector<2x128xf32>
    %8 = arith.negf %7 : vector<2x128xf32>
    %9 = math.exp %8 : vector<2x128xf32>
    %cst_5 = arith.constant 1.000000e+00 : f32
    %10 = vector.broadcast %cst_5 : f32 to vector<2x128xf32>
    %11 = arith.addf %10, %9 : vector<2x128xf32>
    %12 = arith.divf %10, %11 : vector<2x128xf32>
    %13 = arith.mulf %7, %12 : vector<2x128xf32>
    %c0_6 = arith.constant 0 : index
    %c0_7 = arith.constant 0 : index
    %14 = vector.load %arg5[%c0_6, %c0_7] : memref<128x128xbf16, #tpu.memory_space<vmem>>, vector<128x128xbf16>
    %15 = arith.truncf %13 : vector<2x128xf32> to vector<2x128xbf16>
    %cst_8 = arith.constant dense<0.000000e+00> : vector<2x128xf32>
    %16 = tpu.matmul %15, %14, %cst_8 {dimension_numbers = #tpu.dot_dimension_numbers<[1], [0], [0], [1], [0, 0, 1, 1], [], []>} : vector<2x128xbf16>, vector<128x128xbf16>, vector<2x128xf32> -> vector<2x128xf32>
    %17 = arith.subf %13, %16 : vector<2x128xf32>
    %18 = arith.mulf %17, %17 : vector<2x128xf32>
    %19 = arith.truncf %18 : vector<2x128xf32> to vector<2x128xbf16>
    %cst_9 = arith.constant dense<0.000000e+00> : vector<2x128xf32>
    %20 = tpu.matmul %19, %14, %cst_9 {dimension_numbers = #tpu.dot_dimension_numbers<[1], [0], [0], [1], [0, 0, 1, 1], [], []>} : vector<2x128xbf16>, vector<128x128xbf16>, vector<2x128xf32> -> vector<2x128xf32>
    %cst_10 = arith.constant 9.99999996E-13 : f32
    %21 = vector.broadcast %cst_10 : f32 to vector<2x128xf32>
    %22 = arith.addf %20, %21 : vector<2x128xf32>
    %23 = math.rsqrt %22 : vector<2x128xf32>
    %24 = arith.mulf %17, %23 : vector<2x128xf32>
    %25 = vector.extract_strided_slice %4 {offsets = [1, 0], sizes = [1, 128], strides = [1, 1]} : vector<8x128xf32> to vector<1x128xf32>
    %26 = vector.broadcast %25 : vector<1x128xf32> to vector<2x128xf32>
    %27 = arith.mulf %24, %26 : vector<2x128xf32>
    %28 = vector.extract_strided_slice %4 {offsets = [2, 0], sizes = [1, 128], strides = [1, 1]} : vector<8x128xf32> to vector<1x128xf32>
    %29 = vector.broadcast %28 : vector<1x128xf32> to vector<2x128xf32>
    %30 = arith.addf %27, %29 : vector<2x128xf32>
    %c0_11 = arith.constant 0 : index
    %c0_12 = arith.constant 0 : index
    %31 = vector.load %arg6[%c0_11, %c0_12] : memref<2x128xf32, #tpu.memory_space<vmem>>, vector<2x128xf32>
    tpu.vector_store %arg6[%c0_11, %c0_12], %30 {strides = array<i32>} : memref<2x128xf32, #tpu.memory_space<vmem>>, vector<2x128xf32>,
    return
  }
  func.func @transform_0(%arg0: i32, %arg1: i32) -> (i32, i32) {
    %c0_i32 = arith.constant 0 : i32
    return %arg0, %arg1 : i32, i32
  }
  func.func @transform_1(%arg0: i32, %arg1: i32) -> (i32, i32) {
    %c0_i32 = arith.constant 0 : i32
    %c0_i32_0 = arith.constant 0 : i32
    return %arg1, %c0_i32 : i32, i32
  }
  func.func @transform_2(%arg0: i32, %arg1: i32) -> (i32, i32) {
    %c0_i32 = arith.constant 0 : i32
    %c0_i32_0 = arith.constant 0 : i32
    %c0_i32_1 = arith.constant 0 : i32
    return %c0_i32, %c0_i32_0 : i32, i32
  }
  func.func @transform_3(%arg0: i32, %arg1: i32) -> (i32, i32) {
    %c0_i32 = arith.constant 0 : i32
    %c0_i32_0 = arith.constant 0 : i32
    %c0_i32_1 = arith.constant 0 : i32
    return %c0_i32, %c0_i32_0 : i32, i32
  }
  func.func @transform_4(%arg0: i32, %arg1: i32) -> (i32, i32) {
    %c0_i32 = arith.constant 0 : i32
    %c0_i32_0 = arith.constant 0 : i32
    return %arg0, %c0_i32 : i32, i32
  }
}

module attributes {stable_mosaic.version = 11 : i64} {
  func.func @_downsample_kernel(%arg0: i32, %arg1: i32, %arg2: memref<2x512xf32, #tpu.memory_space<vmem>>, %arg3: memref<512x128xbf16, #tpu.memory_space<vmem>>, %arg4: memref<8x128xf32, #tpu.memory_space<vmem>>, %arg5: memref<128x128xbf16, #tpu.memory_space<vmem>>, %arg6: memref<2x128xf32, #tpu.memory_space<vmem>>) attributes {dimension_semantics = [#tpu.dimension_semantics<parallel>, #tpu.dimension_semantics<arbitrary>], iteration_bounds = array<i64: 1, 1>, scalar_prefetch = 0 : i64, scratch_operands = 0 : i64, tpu.core_type = #tpu.core_type<tc>, window_params = [{transform_indices = @transform_0, window_bounds = array<i64: 2, 512>}, {transform_indices = @transform_1, window_bounds = array<i64: 512, 128>}, {pipeline_mode = #tpu.pipeline_mode<synchronous>, transform_indices = @transform_2, window_bounds = array<i64: 8, 128>}, {pipeline_mode = #tpu.pipeline_mode<synchronous>, transform_indices = @transform_3, window_bounds = array<i64: 128, 128>}, {transform_indices = @transform_4, window_bounds = array<i64: 2, 128>}]} {
    %c0 = arith.constant 0 : index
    %c0_0 = arith.constant 0 : index
    %0 = vector.load %arg2[%c0, %c0_0] : memref<2x512xf32, #tpu.memory_space<vmem>>, vector<2x512xf32>
    %1 = arith.truncf %0 : vector<2x512xf32> to vector<2x512xbf16>
    %c0_1 = arith.constant 0 : index
    %c0_2 = arith.constant 0 : index
    %2 = vector.load %arg3[%c0_1, %c0_2] : memref<512x128xbf16, #tpu.memory_space<vmem>>, vector<512x128xbf16>
    %cst = arith.constant dense<0.000000e+00> : vector<2x128xf32>
    %3 = tpu.matmul %1, %2, %cst {dimension_numbers = #tpu.dot_dimension_numbers<[1], [0], [0], [1], [0, 0, 1, 1], [], []>} : vector<2x512xbf16>, vector<512x128xbf16>, vector<2x128xf32> -> vector<2x128xf32>
    %c0_3 = arith.constant 0 : index
    %c0_4 = arith.constant 0 : index
    %4 = vector.load %arg4[%c0_3, %c0_4] : memref<8x128xf32, #tpu.memory_space<vmem>>, vector<8x128xf32>
    %5 = vector.extract_strided_slice %4 {offsets = [0, 0], sizes = [1, 128], strides = [1, 1]} : vector<8x128xf32> to vector<1x128xf32>
    %6 = vector.broadcast %5 : vector<1x128xf32> to vector<2x128xf32>
    %7 = arith.addf %3, %6 : vector<2x128xf32>
    %8 = arith.negf %7 : vector<2x128xf32>
    %9 = math.exp %8 : vector<2x128xf32>
    %cst_5 = arith.constant 1.000000e+00 : f32
    %10 = vector.broadcast %cst_5 : f32 to vector<2x128xf32>
    %11 = arith.addf %10, %9 : vector<2x128xf32>
    %12 = arith.divf %10, %11 : vector<2x128xf32>
    %13 = arith.mulf %7, %12 : vector<2x128xf32>
    %c0_6 = arith.constant 0 : index
    %c0_7 = arith.constant 0 : index
    %14 = vector.load %arg5[%c0_6, %c0_7] : memref<128x128xbf16, #tpu.memory_space<vmem>>, vector<128x128xbf16>
    %15 = arith.truncf %13 : vector<2x128xf32> to vector<2x128xbf16>
    %cst_8 = arith.constant dense<0.000000e+00> : vector<2x128xf32>
    %16 = tpu.matmul %15, %14, %cst_8 {dimension_numbers = #tpu.dot_dimension_numbers<[1], [0], [0], [1], [0, 0, 1, 1], [], []>} : vector<2x128xbf16>, vector<128x128xbf16>, vector<2x128xf32> -> vector<2x128xf32>
    %17 = arith.subf %13, %16 : vector<2x128xf32>
    %18 = arith.mulf %17, %17 : vector<2x128xf32>
    %19 = arith.truncf %18 : vector<2x128xf32> to vector<2x128xbf16>
    %cst_9 = arith.constant dense<0.000000e+00> : vector<2x128xf32>
    %20 = tpu.matmul %19, %14, %cst_9 {dimension_numbers = #tpu.dot_dimension_numbers<[1], [0], [0], [1], [0, 0, 1, 1], [], []>} : vector<2x128xbf16>, vector<128x128xbf16>, vector<2x128xf32> -> vector<2x128xf32>
    %cst_10 = arith.constant 9.99999996E-13 : f32
    %21 = vector.broadcast %cst_10 : f32 to vector<2x128xf32>
    %22 = arith.addf %20, %21 : vector<2x128xf32>
    %23 = math.rsqrt %22 : vector<2x128xf32>
    %24 = arith.mulf %17, %23 : vector<2x128xf32>
    %25 = vector.extract_strided_slice %4 {offsets = [1, 0], sizes = [1, 128], strides = [1, 1]} : vector<8x128xf32> to vector<1x128xf32>
    %26 = vector.broadcast %25 : vector<1x128xf32> to vector<2x128xf32>
    %27 = arith.mulf %24, %26 : vector<2x128xf32>
    %28 = vector.extract_strided_slice %4 {offsets = [2, 0], sizes = [1, 128], strides = [1, 1]} : vector<8x128xf32> to vector<1x128xf32>
    %29 = vector.broadcast %28 : vector<1x128xf32> to vector<2x128xf32>
    %30 = arith.addf %27, %29 : vector<2x128xf32>
    %c0_11 = arith.constant 0 : index
    %c0_12 = arith.constant 0 : index
    %31 = vector.load %arg6[%c0_11, %c0_12] : memref<2x128xf32, #tpu.memory_space<vmem>>, vector<2x128xf32>
    tpu.vector_store %arg6[%c0_11, %c0_12], %30 {strides = array<i32>} : memref<2x128xf32, #tpu.memory_space<vmem>>, vector<2x128xf32>,
    return
  }
  func.func @transform_0(%arg0: i32, %arg1: i32) -> (i32, i32) {
    %c0_i32 = arith.constant 0 : i32
    return %arg0, %arg1 : i32, i32
  }
  func.func @transform_1(%arg0: i32, %arg1: i32) -> (i32, i32) {
    %c0_i32 = arith.constant 0 : i32
    %c0_i32_0 = arith.constant 0 : i32
    return %arg1, %c0_i32 : i32, i32
  }
  func.func @transform_2(%arg0: i32, %arg1: i32) -> (i32, i32) {
    %c0_i32 = arith.constant 0 : i32
    %c0_i32_0 = arith.constant 0 : i32
    %c0_i32_1 = arith.constant 0 : i32
    return %c0_i32, %c0_i32_0 : i32, i32
  }
  func.func @transform_3(%arg0: i32, %arg1: i32) -> (i32, i32) {
    %c0_i32 = arith.constant 0 : i32
    %c0_i32_0 = arith.constant 0 : i32
    %c0_i32_1 = arith.constant 0 : i32
    return %c0_i32, %c0_i32_0 : i32, i32
  }
  func.func @transform_4(%arg0: i32, %arg1: i32) -> (i32, i32) {
    %c0_i32 = arith.constant 0 : i32
    %c0_i32_0 = arith.constant 0 : i32
    return %arg0, %c0_i32 : i32, i32
  }
}

</mosaic_0001>

<llo_original>
// kernel: tpu_custom_call.1
$region0: #{tpu_custom_call.1}
  #allocation0 [shape = 'u32[]', space=smem, size = 0x4, offset = 0x4, fixed_abs, tag = 'smem constant byte address 0x4 - core index']
  #allocation1 [shape = 'u32[144,128]{1,0:T(1,128)}', space=vmem, size = 0x12000, scoped, tag = 'internal scratch']
  %s0 = inlined_call_operand.hbm [shape: f32[2,512], index: 0, kind: input, shape index: {}]
  %s1 = inlined_call_operand.hbm [shape: bf16[512,128], index: 1, kind: input, shape index: {}]
  %s2 = inlined_call_operand.hbm [shape: f32[8,128], index: 2, kind: input, shape index: {}]
  %s3 = inlined_call_operand.hbm [shape: bf16[128,128], index: 3, kind: input, shape index: {}]
  %s4 = inlined_call_operand.hbm [shape: f32[2,128], index: 4, kind: output, shape index: {}]
  %s5 = sld [smem:[#allocation0]]
  $region42: #{tpu_custom_call.1} parent=0
    _
  %s7 = ssub.s32 1, %s5
  %s8 = scalar_select 0, %s7, %s5
  $region1: #{tpu_custom_call.1} parent=0
    #allocation2 [shape = 'u8[4096]{0}', space=vmem, size = 0x1000, scoped, tag = 'input window, operand 0, single buffered']
    #allocation3 [shape = 's32[1]{0}', space=sflag, size = 0x4, scoped, tag = 'scoped memory for tpu_custom_call.1']
    #allocation4 [shape = 's32[1]{0}', space=sflag, size = 0x4, scoped, tag = 'scoped memory for tpu_custom_call.1']
    #allocation5 [shape = 'u8[131072]{0}', space=vmem, size = 0x20000, scoped, tag = 'input window, operand 1, single buffered']
    #allocation6 [shape = 's32[1]{0}', space=sflag, size = 0x4, scoped, tag = 'scoped memory for tpu_custom_call.1']
    #allocation7 [shape = 'u8[4096]{0}', space=vmem, size = 0x1000, scoped, tag = 'input window, operand 2, single buffered']
    #allocation8 [shape = 'u8[32768]{0}', space=vmem, size = 0x8000, scoped, tag = 'input window, operand 3, single buffered']
    #allocation9 [shape = 's32[1]{0}', space=sflag, size = 0x4, scoped, tag = 'scoped memory for tpu_custom_call.1']
    #allocation10 [shape = 'u8[1024]{0}', space=vmem, size = 0x400, scoped, tag = 'output window, operand 0, single buffered']
    %9 = vsyncpa [#allocation3], 0
    %10 = vsyncpa [#allocation6], 0
    %11 = vsyncpa [#allocation9], 0
    %12 = vsyncpa [#allocation4], 0
    // Predicated region
    $region2: #{tpu_custom_call.1} parent=1 // pred_check
      _
    $region3: #{tpu_custom_call.1} parent=1 // pred_check_branch
      %14 = sbr.rel (0) target = $region5
    $region4: #{tpu_custom_call.1} parent=1 // pred_region
      %s16 = ssub.s32 128, 128
      %17 = vsyncadd [#allocation3], %s16
      %s19 = sshll.u32 [#allocation2], 4
      %s20 = int_to_ptr.vmem [resolvable:$true] %s19
      %22 = dma.hbm_to_vmem [thread:$0]  %s0, 128, %s20, [#allocation3]
    $region5: #{tpu_custom_call.1} parent=1 // pred_fallthru
      _
    // Predicated region
    $region6: #{tpu_custom_call.1} parent=1 // pred_check
      _
    $region7: #{tpu_custom_call.1} parent=1 // pred_check_branch
      %24 = sbr.rel (0) target = $region9
    $region8: #{tpu_custom_call.1} parent=1 // pred_region
      %s26 = ssub.s32 4096, 4096
      %27 = vsyncadd [#allocation6], %s26
      %s28 = sshll.u32 [#allocation5], 4
      %s29 = int_to_ptr.vmem [resolvable:$true] %s28
      %34 = dma.hbm_to_vmem [thread:$0]  %s1, 4096, %s29, [#allocation6], 64, 64, 4
    $region9: #{tpu_custom_call.1} parent=1 // pred_fallthru
      _
    // Predicated region
    $region10: #{tpu_custom_call.1} parent=1 // pred_check
      _
    $region11: #{tpu_custom_call.1} parent=1 // pred_check_branch
      %36 = sbr.rel (0) target = $region13
    $region12: #{tpu_custom_call.1} parent=1 // pred_region
      %s38 = ssub.s32 128, 128
      %39 = vsyncadd [#allocation6], %s38
      %s41 = sshll.u32 [#allocation7], 4
      %s42 = int_to_ptr.vmem [resolvable:$true] %s41
      %44 = dma.hbm_to_vmem [thread:$0]  %s2, 128, %s42, [#allocation6]
    $region13: #{tpu_custom_call.1} parent=1 // pred_fallthru
      _
    // Predicated region
    $region14: #{tpu_custom_call.1} parent=1 // pred_check
      _
    $region15: #{tpu_custom_call.1} parent=1 // pred_check_branch
      %46 = sbr.rel (0) target = $region17
    $region16: #{tpu_custom_call.1} parent=1 // pred_region
      %s48 = ssub.s32 1024, 1024
      %49 = vsyncadd [#allocation9], %s48
      %s50 = sshll.u32 [#allocation8], 4
      %s51 = int_to_ptr.vmem [resolvable:$true] %s50
      %56 = dma.hbm_to_vmem [thread:$0]  %s3, 1024, %s51, [#allocation9], 64, 64, 4
    $region17: #{tpu_custom_call.1} parent=1 // pred_fallthru
      _
    // Predicated region
    $region18: #{tpu_custom_call.1} parent=1 // pred_check
      _
    $region19: #{tpu_custom_call.1} parent=1 // pred_check_branch
      %58 = sbr.rel (0) target = $region21
    $region20: #{tpu_custom_call.1} parent=1 // pred_region
      %59 = dma.done [#allocation3], 128
    $region21: #{tpu_custom_call.1} parent=1 // pred_fallthru
      _
    // Predicated region
    $region22: #{tpu_custom_call.1} parent=1 // pred_check
      _
    $region23: #{tpu_custom_call.1} parent=1 // pred_check_branch
      %61 = sbr.rel (0) target = $region25
    $region24: #{tpu_custom_call.1} parent=1 // pred_region
      %62 = dma.done [#allocation6], 4096
    $region25: #{tpu_custom_call.1} parent=1 // pred_fallthru
      _
    // Predicated region
    $region26: #{tpu_custom_call.1} parent=1 // pred_check
      _
    $region27: #{tpu_custom_call.1} parent=1 // pred_check_branch
      %64 = sbr.rel (0) target = $region29
    $region28: #{tpu_custom_call.1} parent=1 // pred_region
      %65 = dma.done [#allocation6], 128
    $region29: #{tpu_custom_call.1} parent=1 // pred_fallthru
      _
    // Predicated region
    $region30: #{tpu_custom_call.1} parent=1 // pred_check
      _
    $region31: #{tpu_custom_call.1} parent=1 // pred_check_branch
      %67 = sbr.rel (0) target = $region33
    $region32: #{tpu_custom_call.1} parent=1 // pred_region
      %68 = dma.done [#allocation9], 1024
    $region33: #{tpu_custom_call.1} parent=1 // pred_fallthru
      _
    %v70 = vld [vmem:[#allocation2] sm:$0xff]
    %v72 = vcombine.high %v70, %v70
    %v74 = vunpack.c.l.s4 1983009808
    %v75 = vunpack.c.0.s8 %v74
    %v76 = vlaneseq
    %v77 = vshrl.u32 %v76, 7
    %v78 = vsub.s32 %v75, %v77
    %v79 = vrot.slane %v70, %v78
    %v81 = vunpack.c.l.s4 1983009808
    %v82 = vunpack.c.0.s8 %v81
    %v83 = vlaneseq
    %v84 = vshrl.u32 %v83, 7
    %v85 = vsub.s32 %v82, %v84
    %v86 = vrot.slane %v72, %v85
    %v87 = vcombine.high %v79, %v79
    %v88 = vcombine.high %v86, %v86
    %v93 = vpack.c.bf16 %v79, %v79
    %v94 = vpack.c.bf16 %v87, %v87
    %v95 = vpack.c.bf16 %v86, %v86
    %v96 = vpack.c.bf16 %v88, %v88
    %v97 = vld [vmem:[#allocation5] sm:$0xf]
    %v98 = vld [vmem:[#allocation5 + $0x4] sm:$0xf]
    %v99 = vld [vmem:[#allocation5 + $0x8] sm:$0xf]
    %v100 = vld [vmem:[#allocation5 + $0xc] sm:$0xf]
    %v101 = vld [vmem:[#allocation5 + $0x10] sm:$0xf]
    %v102 = vld [vmem:[#allocation5 + $0x14] sm:$0xf]
    %v103 = vld [vmem:[#allocation5 + $0x18] sm:$0xf]
    %v104 = vld [vmem:[#allocation5 + $0x1c] sm:$0xf]
    %v105 = vld [vmem:[#allocation5 + $0x20] sm:$0xf]
    %v106 = vld [vmem:[#allocation5 + $0x24] sm:$0xf]
    %v107 = vld [vmem:[#allocation5 + $0x28] sm:$0xf]
    %v108 = vld [vmem:[#allocation5 + $0x2c] sm:$0xf]
    %v109 = vld [vmem:[#allocation5 + $0x30] sm:$0xf]
    %v110 = vld [vmem:[#allocation5 + $0x34] sm:$0xf]
    %v111 = vld [vmem:[#allocation5 + $0x38] sm:$0xf]
    %v112 = vld [vmem:[#allocation5 + $0x3c] sm:$0xf]
    %v113 = vld [vmem:[#allocation5 + $0x40] sm:$0xf]
    %v114 = vld [vmem:[#allocation5 + $0x44] sm:$0xf]
    %v115 = vld [vmem:[#allocation5 + $0x48] sm:$0xf]
    %v116 = vld [vmem:[#allocation5 + $0x4c] sm:$0xf]
    %v117 = vld [vmem:[#allocation5 + $0x50] sm:$0xf]
    %v118 = vld [vmem:[#allocation5 + $0x54] sm:$0xf]
    %v119 = vld [vmem:[#allocation5 + $0x58] sm:$0xf]
    %v120 = vld [vmem:[#allocation5 + $0x5c] sm:$0xf]
    %v121 = vld [vmem:[#allocation5 + $0x60] sm:$0xf]
    %v122 = vld [vmem:[#allocation5 + $0x64] sm:$0xf]
    %v123 = vld [vmem:[#allocation5 + $0x68] sm:$0xf]
    %v124 = vld [vmem:[#allocation5 + $0x6c] sm:$0xf]
    %v125 = vld [vmem:[#allocation5 + $0x70] sm:$0xf]
    %v126 = vld [vmem:[#allocation5 + $0x74] sm:$0xf]
    %v127 = vld [vmem:[#allocation5 + $0x78] sm:$0xf]
    %v128 = vld [vmem:[#allocation5 + $0x7c] sm:$0xf]
    %v129 = vld [vmem:[#allocation5 + $0x80] sm:$0xf]
    %v130 = vld [vmem:[#allocation5 + $0x84] sm:$0xf]
    %v131 = vld [vmem:[#allocation5 + $0x88] sm:$0xf]
    %v132 = vld [vmem:[#allocation5 + $0x8c] sm:$0xf]
    %v133 = vld [vmem:[#allocation5 + $0x90] sm:$0xf]
    %v134 = vld [vmem:[#allocation5 + $0x94] sm:$0xf]
    %v135 = vld [vmem:[#allocation5 + $0x98] sm:$0xf]
    %v136 = vld [vmem:[#allocation5 + $0x9c] sm:$0xf]
    %v137 = vld [vmem:[#allocation5 + $0xa0] sm:$0xf]
    %v138 = vld [vmem:[#allocation5 + $0xa4] sm:$0xf]
    %v139 = vld [vmem:[#allocation5 + $0xa8] sm:$0xf]
    %v140 = vld [vmem:[#allocation5 + $0xac] sm:$0xf]
    %v141 = vld [vmem:[#allocation5 + $0xb0] sm:$0xf]
    %v142 = vld [vmem:[#allocation5 + $0xb4] sm:$0xf]
    %v143 = vld [vmem:[#allocation5 + $0xb8] sm:$0xf]
    %v144 = vld [vmem:[#allocation5 + $0xbc] sm:$0xf]
    %v145 = vld [vmem:[#allocation5 + $0xc0] sm:$0xf]
    %v146 = vld [vmem:[#allocation5 + $0xc4] sm:$0xf]
    %v147 = vld [vmem:[#allocation5 + $0xc8] sm:$0xf]
    %v148 = vld [vmem:[#allocation5 + $0xcc] sm:$0xf]
    %v149 = vld [vmem:[#allocation5 + $0xd0] sm:$0xf]
    %v150 = vld [vmem:[#allocation5 + $0xd4] sm:$0xf]
    %v151 = vld [vmem:[#allocation5 + $0xd8] sm:$0xf]
    %v152 = vld [vmem:[#allocation5 + $0xdc] sm:$0xf]
    %v153 = vld [vmem:[#allocation5 + $0xe0] sm:$0xf]
    %v154 = vld [vmem:[#allocation5 + $0xe4] sm:$0xf]
    %v155 = vld [vmem:[#allocation5 + $0xe8] sm:$0xf]
    %v156 = vld [vmem:[#allocation5 + $0xec] sm:$0xf]
    %v157 = vld [vmem:[#allocation5 + $0xf0] sm:$0xf]
    %v158 = vld [vmem:[#allocation5 + $0xf4] sm:$0xf]
    %v159 = vld [vmem:[#allocation5 + $0xf8] sm:$0xf]
    %v160 = vld [vmem:[#allocation5 + $0xfc] sm:$0xf]
    %v161 = vld [vmem:[#allocation7] sm:$0xff]
    %v162 = vlaneseq
    %v163 = vshrl.u32 %v162, 7
    %v164 = vsub.s32 0, %v163
    %v165 = vrot.slane %v161, %v164
    %v230 = vunpack.c.l.b16 %v97
    %v231 = vunpack.c.l.b16 %v98
    %v232 = vunpack.c.l.b16 %v99
    %v233 = vunpack.c.l.b16 %v100
    %v234 = vunpack.c.l.b16 %v101
    %v235 = vunpack.c.l.b16 %v102
    %v236 = vunpack.c.l.b16 %v103
    %v237 = vunpack.c.l.b16 %v104
    %v238 = vunpack.c.l.b16 %v105
    %v239 = vunpack.c.l.b16 %v106
    %v240 = vunpack.c.l.b16 %v107
    %v241 = vunpack.c.l.b16 %v108
    %v242 = vunpack.c.l.b16 %v109
    %v243 = vunpack.c.l.b16 %v110
    %v244 = vunpack.c.l.b16 %v111
    %v245 = vunpack.c.l.b16 %v112
    %v246 = vunpack.c.l.b16 %v113
    %v247 = vunpack.c.l.b16 %v114
    %v248 = vunpack.c.l.b16 %v115
    %v249 = vunpack.c.l.b16 %v116
    %v250 = vunpack.c.l.b16 %v117
    %v251 = vunpack.c.l.b16 %v118
    %v252 = vunpack.c.l.b16 %v119
    %v253 = vunpack.c.l.b16 %v120
    %v254 = vunpack.c.l.b16 %v121
    %v255 = vunpack.c.l.b16 %v122
    %v256 = vunpack.c.l.b16 %v123
    %v257 = vunpack.c.l.b16 %v124
    %v258 = vunpack.c.l.b16 %v125
    %v259 = vunpack.c.l.b16 %v126
    %v260 = vunpack.c.l.b16 %v127
    %v261 = vunpack.c.l.b16 %v128
    %v262 = vunpack.c.l.b16 %v129
    %v263 = vunpack.c.l.b16 %v130
    %v264 = vunpack.c.l.b16 %v131
    %v265 = vunpack.c.l.b16 %v132
    %v266 = vunpack.c.l.b16 %v133
    %v267 = vunpack.c.l.b16 %v134
    %v268 = vunpack.c.l.b16 %v135
    %v269 = vunpack.c.l.b16 %v136
    %v270 = vunpack.c.l.b16 %v137
    %v271 = vunpack.c.l.b16 %v138
    %v272 = vunpack.c.l.b16 %v139
    %v273 = vunpack.c.l.b16 %v140
    %v274 = vunpack.c.l.b16 %v141
    %v275 = vunpack.c.l.b16 %v142
    %v276 = vunpack.c.l.b16 %v143
    %v277 = vunpack.c.l.b16 %v144
    %v278 = vunpack.c.l.b16 %v145
    %v279 = vunpack.c.l.b16 %v146
    %v280 = vunpack.c.l.b16 %v147
    %v281 = vunpack.c.l.b16 %v148
    %v282 = vunpack.c.l.b16 %v149
    %v283 = vunpack.c.l.b16 %v150
    %v284 = vunpack.c.l.b16 %v151
    %v285 = vunpack.c.l.b16 %v152
    %v286 = vunpack.c.l.b16 %v153
    %v287 = vunpack.c.l.b16 %v154
    %v288 = vunpack.c.l.b16 %v155
    %v289 = vunpack.c.l.b16 %v156
    %v290 = vunpack.c.l.b16 %v157
    %v291 = vunpack.c.l.b16 %v158
    %v292 = vunpack.c.l.b16 %v159
    %v293 = vunpack.c.l.b16 %v160
    %v294 = vpack.c.b16 %v231, %v230
    %v295 = vpack.c.b16 %v233, %v232
    %v296 = vpack.c.b16 %v235, %v234
    %v297 = vpack.c.b16 %v237, %v236
    %v298 = vpack.c.b16 %v239, %v238
    %v299 = vpack.c.b16 %v241, %v240
    %v300 = vpack.c.b16 %v243, %v242
    %v301 = vpack.c.b16 %v245, %v244
    %v302 = vpack.c.b16 %v247, %v246
    %v303 = vpack.c.b16 %v249, %v248
    %v304 = vpack.c.b16 %v251, %v250
    %v305 = vpack.c.b16 %v253, %v252
    %v306 = vpack.c.b16 %v255, %v254
    %v307 = vpack.c.b16 %v257, %v256
    %v308 = vpack.c.b16 %v259, %v258
    %v309 = vpack.c.b16 %v261, %v260
    %v310 = vpack.c.b16 %v263, %v262
    %v311 = vpack.c.b16 %v265, %v264
    %v312 = vpack.c.b16 %v267, %v266
    %v313 = vpack.c.b16 %v269, %v268
    %v314 = vpack.c.b16 %v271, %v270
    %v315 = vpack.c.b16 %v273, %v272
    %v316 = vpack.c.b16 %v275, %v274
    %v317 = vpack.c.b16 %v277, %v276
    %v318 = vpack.c.b16 %v279, %v278
    %v319 = vpack.c.b16 %v281, %v280
    %v320 = vpack.c.b16 %v283, %v282
    %v321 = vpack.c.b16 %v285, %v284
    %v322 = vpack.c.b16 %v287, %v286
    %v323 = vpack.c.b16 %v289, %v288
    %v324 = vpack.c.b16 %v291, %v290
    %v325 = vpack.c.b16 %v293, %v292
    %358 = vmatprep.subr.bf16.mxu0 0
    %359 = vmatpush1.bf16.msra.mxu0 %v294
    %360 = vmatprep.subr.bf16.mxu0 0
    %361 = vmatpush1.bf16.msra.mxu0 %v295
    %362 = vmatprep.subr.bf16.mxu0 0
    %363 = vmatpush1.bf16.msra.mxu0 %v296
    %364 = vmatprep.subr.bf16.mxu0 0
    %365 = vmatpush1.bf16.msra.mxu0 %v297
    %366 = vmatprep.subr.bf16.mxu0 0
    %367 = vmatpush1.bf16.msra.mxu0 %v298
    %368 = vmatprep.subr.bf16.mxu0 0
    %369 = vmatpush1.bf16.msra.mxu0 %v299
    %370 = vmatprep.subr.bf16.mxu0 0
    %371 = vmatpush1.bf16.msra.mxu0 %v300
    %372 = vmatprep.subr.bf16.mxu0 0
    %373 = vmatpush1.bf16.msra.mxu0 %v301
    %374 = vmatprep.subr.bf16.mxu0 0
    %375 = vmatpush1.bf16.msra.mxu0 %v302
    %376 = vmatprep.subr.bf16.mxu0 0
    %377 = vmatpush1.bf16.msra.mxu0 %v303
    %378 = vmatprep.subr.bf16.mxu0 0
    %379 = vmatpush1.bf16.msra.mxu0 %v304
    %380 = vmatprep.subr.bf16.mxu0 0
    %381 = vmatpush1.bf16.msra.mxu0 %v305
    %382 = vmatprep.subr.bf16.mxu0 0
    %383 = vmatpush1.bf16.msra.mxu0 %v306
    %384 = vmatprep.subr.bf16.mxu0 0
    %385 = vmatpush1.bf16.msra.mxu0 %v307
    %386 = vmatprep.subr.bf16.mxu0 0
    %387 = vmatpush1.bf16.msra.mxu0 %v308
    %388 = vmatprep.subr.bf16.mxu0 0
    %389 = vmatpush1.bf16.msra.mxu0 %v309
    %390 = vmatprep.mubr.bf16.mxu0 %v94
    %391 = vmatmul.mubr.bf16.gmra.mrb[0].mxu0 %v93
    %v392 = vpop.f32.mrb[0].mxu0
    %v393 = vadd.f32 %v165, %v392
    %v394 = vpop.f32.mrb[0].mxu0
    %v395 = vpop.f32.mrb[0].mxu0
    %v396 = vpop.f32.mrb[0].mxu0
    %397 = vdwg.mxu0
    %398 = vmatprep.subr.bf16.mxu0 0
    %399 = vmatpush1.bf16.msra.mxu0 %v310
    %400 = vmatprep.subr.bf16.mxu0 0
    %401 = vmatpush1.bf16.msra.mxu0 %v311
    %402 = vmatprep.subr.bf16.mxu0 0
    %403 = vmatpush1.bf16.msra.mxu0 %v312
    %404 = vmatprep.subr.bf16.mxu0 0
    %405 = vmatpush1.bf16.msra.mxu0 %v313
    %406 = vmatprep.subr.bf16.mxu0 0
    %407 = vmatpush1.bf16.msra.mxu0 %v314
    %408 = vmatprep.subr.bf16.mxu0 0
    %409 = vmatpush1.bf16.msra.mxu0 %v315
    %410 = vmatprep.subr.bf16.mxu0 0
    %411 = vmatpush1.bf16.msra.mxu0 %v316
    %412 = vmatprep.subr.bf16.mxu0 0
    %413 = vmatpush1.bf16.msra.mxu0 %v317
    %414 = vmatprep.subr.bf16.mxu0 0
    %415 = vmatpush1.bf16.msra.mxu0 %v318
    %416 = vmatprep.subr.bf16.mxu0 0
    %417 = vmatpush1.bf16.msra.mxu0 %v319
    %418 = vmatprep.subr.bf16.mxu0 0
    %419 = vmatpush1.bf16.msra.mxu0 %v320
    %420 = vmatprep.subr.bf16.mxu0 0
    %421 = vmatpush1.bf16.msra.mxu0 %v321
    %422 = vmatprep.subr.bf16.mxu0 0
    %423 = vmatpush1.bf16.msra.mxu0 %v322
    %424 = vmatprep.subr.bf16.mxu0 0
    %425 = vmatpush1.bf16.msra.mxu0 %v323
    %426 = vmatprep.subr.bf16.mxu0 0
    %427 = vmatpush1.bf16.msra.mxu0 %v324
    %428 = vmatprep.subr.bf16.mxu0 0
    %429 = vmatpush1.bf16.msra.mxu0 %v325
    %430 = vmatprep.mubr.bf16.mxu0 %v96
    %431 = vmatmul.mubr.bf16.gmra.mrb[0].mxu0 %v95
    %v432 = vpop.f32.mrb[0].mxu0
    %v433 = vadd.f32 %v393, %v432
    %v434 = vpop.f32.mrb[0].mxu0
    %v435 = vpop.f32.mrb[0].mxu0
    %v436 = vpop.f32.mrb[0].mxu0
    %437 = vdwg.mxu0
    %v438 = vxor.u32 %v433, 2147483648
    %v439 = vmul.f32 %v438, 1.442695
    %v440 = vpow.pop %v439
    %v441 = vadd.f32 %v440, 1.0
    %v442 = vrcp.pop %v441
    %v443 = vmul.f32 1.0, %v442
    %v444 = vmul.f32 %v433, %v443
    %v445 = vld [vmem:[#allocation8] sm:$0xf]
    %v446 = vld [vmem:[#allocation8 + $0x4] sm:$0xf]
    %v447 = vld [vmem:[#allocation8 + $0x8] sm:$0xf]
    %v448 = vld [vmem:[#allocation8 + $0xc] sm:$0xf]
    %v449 = vld [vmem:[#allocation8 + $0x10] sm:$0xf]
    %v450 = vld [vmem:[#allocation8 + $0x14] sm:$0xf]
    %v451 = vld [vmem:[#allocation8 + $0x18] sm:$0xf]
    %v452 = vld [vmem:[#allocation8 + $0x1c] sm:$0xf]
    %v453 = vld [vmem:[#allocation8 + $0x20] sm:$0xf]
    %v454 = vld [vmem:[#allocation8 + $0x24] sm:$0xf]
    %v455 = vld [vmem:[#allocation8 + $0x28] sm:$0xf]
    %v456 = vld [vmem:[#allocation8 + $0x2c] sm:$0xf]
    %v457 = vld [vmem:[#allocation8 + $0x30] sm:$0xf]
    %v458 = vld [vmem:[#allocation8 + $0x34] sm:$0xf]
    %v459 = vld [vmem:[#allocation8 + $0x38] sm:$0xf]
    %v460 = vld [vmem:[#allocation8 + $0x3c] sm:$0xf]
    %v461 = vpack.c.bf16 %v444, %v444
    %v478 = vunpack.c.l.b16 %v445
    %v479 = vunpack.c.l.b16 %v446
    %v480 = vunpack.c.l.b16 %v447
    %v481 = vunpack.c.l.b16 %v448
    %v482 = vunpack.c.l.b16 %v449
    %v483 = vunpack.c.l.b16 %v450
    %v484 = vunpack.c.l.b16 %v451
    %v485 = vunpack.c.l.b16 %v452
    %v486 = vunpack.c.l.b16 %v453
    %v487 = vunpack.c.l.b16 %v454
    %v488 = vunpack.c.l.b16 %v455
    %v489 = vunpack.c.l.b16 %v456
    %v490 = vunpack.c.l.b16 %v457
    %v491 = vunpack.c.l.b16 %v458
    %v492 = vunpack.c.l.b16 %v459
    %v493 = vunpack.c.l.b16 %v460
    %v494 = vpack.c.b16 %v479, %v478
    %v495 = vpack.c.b16 %v481, %v480
    %v496 = vpack.c.b16 %v483, %v482
    %v497 = vpack.c.b16 %v485, %v484
    %v498 = vpack.c.b16 %v487, %v486
    %v499 = vpack.c.b16 %v489, %v488
    %v500 = vpack.c.b16 %v491, %v490
    %v501 = vpack.c.b16 %v493, %v492
    %510 = vmatprep.subr.bf16.mxu0 0
    %511 = vmatpush1.bf16.msra.mxu0 %v494
    %512 = vmatprep.subr.bf16.mxu0 0
    %513 = vmatpush1.bf16.msra.mxu0 %v495
    %514 = vmatprep.subr.bf16.mxu0 0
    %515 = vmatpush1.bf16.msra.mxu0 %v496
    %516 = vmatprep.subr.bf16.mxu0 0
    %517 = vmatpush1.bf16.msra.mxu0 %v497
    %518 = vmatprep.subr.bf16.mxu0 0
    %519 = vmatpush1.bf16.msra.mxu0 %v498
    %520 = vmatprep.subr.bf16.mxu0 0
    %521 = vmatpush1.bf16.msra.mxu0 %v499
    %522 = vmatprep.subr.bf16.mxu0 0
    %523 = vmatpush1.bf16.msra.mxu0 %v500
    %524 = vmatprep.subr.bf16.mxu0 0
    %525 = vmatpush1.bf16.msra.mxu0 %v501
    %526 = vmatprep.subr.bf16.mxu0 0
    %527 = vmatpush1.bf16.msra.mxu0 0
    %528 = vmatprep.subr.bf16.mxu0 0
    %529 = vmatpush1.bf16.msra.mxu0 0
    %530 = vmatprep.subr.bf16.mxu0 0
    %531 = vmatpush1.bf16.msra.mxu0 0
    %532 = vmatprep.subr.bf16.mxu0 0
    %533 = vmatpush1.bf16.msra.mxu0 0
    %534 = vmatprep.subr.bf16.mxu0 0
    %535 = vmatpush1.bf16.msra.mxu0 0
    %536 = vmatprep.subr.bf16.mxu0 0
    %537 = vmatpush1.bf16.msra.mxu0 0
    %538 = vmatprep.subr.bf16.mxu0 0
    %539 = vmatpush1.bf16.msra.mxu0 0
    %540 = vmatprep.subr.bf16.mxu0 0
    %541 = vmatpush1.bf16.msra.mxu0 0
    %542 = vmatprep.mubr.bf16.mxu0 0
    %543 = vmatmul.mubr.bf16.gmra.mrb[0].mxu0 %v461
    %v544 = vpop.f32.mrb[0].mxu0
    %v545 = vadd.f32 0.0, %v544
    %v546 = vpop.f32.mrb[0].mxu0
    %v547 = vpop.f32.mrb[0].mxu0
    %v548 = vpop.f32.mrb[0].mxu0
    %549 = vdwg.mxu0
    %v550 = vsub.f32 %v444, %v545
    %v551 = vmul.f32 %v550, %v550
    %v552 = vpack.c.bf16 %v551, %v551
    %553 = vmatprep.subr.bf16.mxu0 0
    %554 = vmatpush1.bf16.msra.mxu0 %v494
    %555 = vmatprep.subr.bf16.mxu0 0
    %556 = vmatpush1.bf16.msra.mxu0 %v495
    %557 = vmatprep.subr.bf16.mxu0 0
    %558 = vmatpush1.bf16.msra.mxu0 %v496
    %559 = vmatprep.subr.bf16.mxu0 0
    %560 = vmatpush1.bf16.msra.mxu0 %v497
    %561 = vmatprep.subr.bf16.mxu0 0
    %562 = vmatpush1.bf16.msra.mxu0 %v498
    %563 = vmatprep.subr.bf16.mxu0 0
    %564 = vmatpush1.bf16.msra.mxu0 %v499
    %565 = vmatprep.subr.bf16.mxu0 0
    %566 = vmatpush1.bf16.msra.mxu0 %v500
    %567 = vmatprep.subr.bf16.mxu0 0
    %568 = vmatpush1.bf16.msra.mxu0 %v501
    %569 = vmatprep.subr.bf16.mxu0 0
    %570 = vmatpush1.bf16.msra.mxu0 0
    %571 = vmatprep.subr.bf16.mxu0 0
    %572 = vmatpush1.bf16.msra.mxu0 0
    %573 = vmatprep.subr.bf16.mxu0 0
    %574 = vmatpush1.bf16.msra.mxu0 0
    %575 = vmatprep.subr.bf16.mxu0 0
    %576 = vmatpush1.bf16.msra.mxu0 0
    %577 = vmatprep.subr.bf16.mxu0 0
    %578 = vmatpush1.bf16.msra.mxu0 0
    %579 = vmatprep.subr.bf16.mxu0 0
    %580 = vmatpush1.bf16.msra.mxu0 0
    %581 = vmatprep.subr.bf16.mxu0 0
    %582 = vmatpush1.bf16.msra.mxu0 0
    %583 = vmatprep.subr.bf16.mxu0 0
    %584 = vmatpush1.bf16.msra.mxu0 0
    %585 = vmatprep.mubr.bf16.mxu0 0
    %586 = vmatmul.mubr.bf16.gmra.mrb[0].mxu0 %v552
    %v587 = vpop.f32.mrb[0].mxu0
    %v588 = vadd.f32 1e-12, %v587
    %v589 = vpop.f32.mrb[0].mxu0
    %v590 = vpop.f32.mrb[0].mxu0
    %v591 = vpop.f32.mrb[0].mxu0
    %592 = vdwg.mxu0
    %v593 = vrsqrt.pop %v588
    %v594 = vmul.f32 %v550, %v593
    %v595 = vlaneseq
    %v596 = vshrl.u32 %v595, 7
    %v597 = vsub.s32 1, %v596
    %v598 = vrot.slane %v161, %v597
    %v599 = vmul.f32 %v594, %v598
    %v600 = vlaneseq
    %v601 = vshrl.u32 %v600, 7
    %v602 = vsub.s32 2, %v601
    %v603 = vrot.slane %v161, %v602
    %v604 = vadd.f32 %v599, %v603
    %605 = vst [vmem:[#allocation10] sm:$0x3] %v604
    // Predicated region
    $region34: #{tpu_custom_call.1} parent=1 // pred_check
      _
    $region35: #{tpu_custom_call.1} parent=1 // pred_check_branch
      %607 = sbr.rel (0) target = $region37
    $region36: #{tpu_custom_call.1} parent=1 // pred_region
      %s609 = ssub.s32 32, 32
      %610 = vsyncadd [#allocation4], %s609
      %s612 = sshll.u32 [#allocation10], 4
      %s613 = int_to_ptr.vmem [resolvable:$true] %s612
      %615 = dma.vmem_to_hbm [thread:$0]  %s613, 32, %s4, [#allocation4]
    $region37: #{tpu_custom_call.1} parent=1 // pred_fallthru
      _
    // Predicated region
    $region38: #{tpu_custom_call.1} parent=1 // pred_check
      _
    $region39: #{tpu_custom_call.1} parent=1 // pred_check_branch
      %617 = sbr.rel (0) target = $region41
    $region40: #{tpu_custom_call.1} parent=1 // pred_region
      %618 = dma.done [#allocation4], 32
    $region41: #{tpu_custom_call.1} parent=1 // pred_fallthru
      _
    %619 = vsyncpa [#allocation3], 1
    %620 = vsyncpa [#allocation6], 1
    %621 = vsyncpa [#allocation9], 1
    %622 = vsyncpa [#allocation4], 1

// kernel: tpu_custom_call.1
$region0: #{tpu_custom_call.1}
  #allocation0 [shape = 'u32[]', space=smem, size = 0x4, offset = 0x4, fixed_abs, tag = 'smem constant byte address 0x4 - core index']
  #allocation1 [shape = 'u32[144,128]{1,0:T(1,128)}', space=vmem, size = 0x12000, scoped, tag = 'internal scratch']
  %s0 = inlined_call_operand.hbm [shape: f32[2,512], index: 0, kind: input, shape index: {}]
  %s1 = inlined_call_operand.hbm [shape: bf16[512,128], index: 1, kind: input, shape index: {}]
  %s2 = inlined_call_operand.hbm [shape: f32[8,128], index: 2, kind: input, shape index: {}]
  %s3 = inlined_call_operand.hbm [shape: bf16[128,128], index: 3, kind: input, shape index: {}]
  %s4 = inlined_call_operand.hbm [shape: f32[2,128], index: 4, kind: output, shape index: {}]
  %s5 = sld [smem:[#allocation0]]
  $region42: #{tpu_custom_call.1} parent=0
    _
  %s7 = ssub.s32 1, %s5
  %s8 = scalar_select 0, %s7, %s5
  $region1: #{tpu_custom_call.1} parent=0
    #allocation2 [shape = 'u8[4096]{0}', space=vmem, size = 0x1000, scoped, tag = 'input window, operand 0, single buffered']
    #allocation3 [shape = 's32[1]{0}', space=sflag, size = 0x4, scoped, tag = 'scoped memory for tpu_custom_call.1']
    #allocation4 [shape = 's32[1]{0}', space=sflag, size = 0x4, scoped, tag = 'scoped memory for tpu_custom_call.1']
    #allocation5 [shape = 'u8[131072]{0}', space=vmem, size = 0x20000, scoped, tag = 'input window, operand 1, single buffered']
    #allocation6 [shape = 's32[1]{0}', space=sflag, size = 0x4, scoped, tag = 'scoped memory for tpu_custom_call.1']
    #allocation7 [shape = 'u8[4096]{0}', space=vmem, size = 0x1000, scoped, tag = 'input window, operand 2, single buffered']
    #allocation8 [shape = 'u8[32768]{0}', space=vmem, size = 0x8000, scoped, tag = 'input window, operand 3, single buffered']
    #allocation9 [shape = 's32[1]{0}', space=sflag, size = 0x4, scoped, tag = 'scoped memory for tpu_custom_call.1']
    #allocation10 [shape = 'u8[1024]{0}', space=vmem, size = 0x400, scoped, tag = 'output window, operand 0, single buffered']
    %9 = vsyncpa [#allocation3], 0
    %10 = vsyncpa [#allocation6], 0
    %11 = vsyncpa [#allocation9], 0
    %12 = vsyncpa [#allocation4], 0
    // Predicated region
    $region2: #{tpu_custom_call.1} parent=1 // pred_check
      _
    $region3: #{tpu_custom_call.1} parent=1 // pred_check_branch
      %14 = sbr.rel (0) target = $region5
    $region4: #{tpu_custom_call.1} parent=1 // pred_region
      %s16 = ssub.s32 128, 128
      %17 = vsyncadd [#allocation3], %s16
      %s19 = sshll.u32 [#allocation2], 4
      %s20 = int_to_ptr.vmem [resolvable:$true] %s19
      %22 = dma.hbm_to_vmem [thread:$0]  %s0, 128, %s20, [#allocation3]
    $region5: #{tpu_custom_call.1} parent=1 // pred_fallthru
      _
    // Predicated region
    $region6: #{tpu_custom_call.1} parent=1 // pred_check
      _
    $region7: #{tpu_custom_call.1} parent=1 // pred_check_branch
      %24 = sbr.rel (0) target = $region9
    $region8: #{tpu_custom_call.1} parent=1 // pred_region
      %s26 = ssub.s32 4096, 4096
      %27 = vsyncadd [#allocation6], %s26
      %s28 = sshll.u32 [#allocation5], 4
      %s29 = int_to_ptr.vmem [resolvable:$true] %s28
      %34 = dma.hbm_to_vmem [thread:$0]  %s1, 4096, %s29, [#allocation6], 64, 64, 4
    $region9: #{tpu_custom_call.1} parent=1 // pred_fallthru
      _
    // Predicated region
    $region10: #{tpu_custom_call.1} parent=1 // pred_check
      _
    $region11: #{tpu_custom_call.1} parent=1 // pred_check_branch
      %36 = sbr.rel (0) target = $region13
    $region12: #{tpu_custom_call.1} parent=1 // pred_region
      %s38 = ssub.s32 128, 128
      %39 = vsyncadd [#allocation6], %s38
      %s41 = sshll.u32 [#allocation7], 4
      %s42 = int_to_ptr.vmem [resolvable:$true] %s41
      %44 = dma.hbm_to_vmem [thread:$0]  %s2, 128, %s42, [#allocation6]
    $region13: #{tpu_custom_call.1} parent=1 // pred_fallthru
      _
    // Predicated region
    $region14: #{tpu_custom_call.1} parent=1 // pred_check
      _
    $region15: #{tpu_custom_call.1} parent=1 // pred_check_branch
      %46 = sbr.rel (0) target = $region17
    $region16: #{tpu_custom_call.1} parent=1 // pred_region
      %s48 = ssub.s32 1024, 1024
      %49 = vsyncadd [#allocation9], %s48
      %s50 = sshll.u32 [#allocation8], 4
      %s51 = int_to_ptr.vmem [resolvable:$true] %s50
      %56 = dma.hbm_to_vmem [thread:$0]  %s3, 1024, %s51, [#allocation9], 64, 64, 4
    $region17: #{tpu_custom_call.1} parent=1 // pred_fallthru
      _
    // Predicated region
    $region18: #{tpu_custom_call.1} parent=1 // pred_check
      _
    $region19: #{tpu_custom_call.1} parent=1 // pred_check_branch
      %58 = sbr.rel (0) target = $region21
    $region20: #{tpu_custom_call.1} parent=1 // pred_region
      %59 = dma.done [#allocation3], 128
    $region21: #{tpu_custom_call.1} parent=1 // pred_fallthru
      _
    // Predicated region
    $region22: #{tpu_custom_call.1} parent=1 // pred_check
      _
    $region23: #{tpu_custom_call.1} parent=1 // pred_check_branch
      %61 = sbr.rel (0) target = $region25
    $region24: #{tpu_custom_call.1} parent=1 // pred_region
      %62 = dma.done [#allocation6], 4096
    $region25: #{tpu_custom_call.1} parent=1 // pred_fallthru
      _
    // Predicated region
    $region26: #{tpu_custom_call.1} parent=1 // pred_check
      _
    $region27: #{tpu_custom_call.1} parent=1 // pred_check_branch
      %64 = sbr.rel (0) target = $region29
    $region28: #{tpu_custom_call.1} parent=1 // pred_region
      %65 = dma.done [#allocation6], 128
    $region29: #{tpu_custom_call.1} parent=1 // pred_fallthru
      _
    // Predicated region
    $region30: #{tpu_custom_call.1} parent=1 // pred_check
      _
    $region31: #{tpu_custom_call.1} parent=1 // pred_check_branch
      %67 = sbr.rel (0) target = $region33
    $region32: #{tpu_custom_call.1} parent=1 // pred_region
      %68 = dma.done [#allocation9], 1024
    $region33: #{tpu_custom_call.1} parent=1 // pred_fallthru
      _
    %v70 = vld [vmem:[#allocation2] sm:$0xff]
    %v72 = vcombine.high %v70, %v70
    %v74 = vunpack.c.l.s4 1983009808
    %v75 = vunpack.c.0.s8 %v74
    %v76 = vlaneseq
    %v77 = vshrl.u32 %v76, 7
    %v78 = vsub.s32 %v75, %v77
    %v79 = vrot.slane %v70, %v78
    %v81 = vunpack.c.l.s4 1983009808
    %v82 = vunpack.c.0.s8 %v81
    %v83 = vlaneseq
    %v84 = vshrl.u32 %v83, 7
    %v85 = vsub.s32 %v82, %v84
    %v86 = vrot.slane %v72, %v85
    %v87 = vcombine.high %v79, %v79
    %v88 = vcombine.high %v86, %v86
    %v93 = vpack.c.bf16 %v79, %v79
    %v94 = vpack.c.bf16 %v87, %v87
    %v95 = vpack.c.bf16 %v86, %v86
    %v96 = vpack.c.bf16 %v88, %v88
    %v97 = vld [vmem:[#allocation5] sm:$0xf]
    %v98 = vld [vmem:[#allocation5 + $0x4] sm:$0xf]
    %v99 = vld [vmem:[#allocation5 + $0x8] sm:$0xf]
    %v100 = vld [vmem:[#allocation5 + $0xc] sm:$0xf]
    %v101 = vld [vmem:[#allocation5 + $0x10] sm:$0xf]
    %v102 = vld [vmem:[#allocation5 + $0x14] sm:$0xf]
    %v103 = vld [vmem:[#allocation5 + $0x18] sm:$0xf]
    %v104 = vld [vmem:[#allocation5 + $0x1c] sm:$0xf]
    %v105 = vld [vmem:[#allocation5 + $0x20] sm:$0xf]
    %v106 = vld [vmem:[#allocation5 + $0x24] sm:$0xf]
    %v107 = vld [vmem:[#allocation5 + $0x28] sm:$0xf]
    %v108 = vld [vmem:[#allocation5 + $0x2c] sm:$0xf]
    %v109 = vld [vmem:[#allocation5 + $0x30] sm:$0xf]
    %v110 = vld [vmem:[#allocation5 + $0x34] sm:$0xf]
    %v111 = vld [vmem:[#allocation5 + $0x38] sm:$0xf]
    %v112 = vld [vmem:[#allocation5 + $0x3c] sm:$0xf]
    %v113 = vld [vmem:[#allocation5 + $0x40] sm:$0xf]
    %v114 = vld [vmem:[#allocation5 + $0x44] sm:$0xf]
    %v115 = vld [vmem:[#allocation5 + $0x48] sm:$0xf]
    %v116 = vld [vmem:[#allocation5 + $0x4c] sm:$0xf]
    %v117 = vld [vmem:[#allocation5 + $0x50] sm:$0xf]
    %v118 = vld [vmem:[#allocation5 + $0x54] sm:$0xf]
    %v119 = vld [vmem:[#allocation5 + $0x58] sm:$0xf]
    %v120 = vld [vmem:[#allocation5 + $0x5c] sm:$0xf]
    %v121 = vld [vmem:[#allocation5 + $0x60] sm:$0xf]
    %v122 = vld [vmem:[#allocation5 + $0x64] sm:$0xf]
    %v123 = vld [vmem:[#allocation5 + $0x68] sm:$0xf]
    %v124 = vld [vmem:[#allocation5 + $0x6c] sm:$0xf]
    %v125 = vld [vmem:[#allocation5 + $0x70] sm:$0xf]
    %v126 = vld [vmem:[#allocation5 + $0x74] sm:$0xf]
    %v127 = vld [vmem:[#allocation5 + $0x78] sm:$0xf]
    %v128 = vld [vmem:[#allocation5 + $0x7c] sm:$0xf]
    %v129 = vld [vmem:[#allocation5 + $0x80] sm:$0xf]
    %v130 = vld [vmem:[#allocation5 + $0x84] sm:$0xf]
    %v131 = vld [vmem:[#allocation5 + $0x88] sm:$0xf]
    %v132 = vld [vmem:[#allocation5 + $0x8c] sm:$0xf]
    %v133 = vld [vmem:[#allocation5 + $0x90] sm:$0xf]
    %v134 = vld [vmem:[#allocation5 + $0x94] sm:$0xf]
    %v135 = vld [vmem:[#allocation5 + $0x98] sm:$0xf]
    %v136 = vld [vmem:[#allocation5 + $0x9c] sm:$0xf]
    %v137 = vld [vmem:[#allocation5 + $0xa0] sm:$0xf]
    %v138 = vld [vmem:[#allocation5 + $0xa4] sm:$0xf]
    %v139 = vld [vmem:[#allocation5 + $0xa8] sm:$0xf]
    %v140 = vld [vmem:[#allocation5 + $0xac] sm:$0xf]
    %v141 = vld [vmem:[#allocation5 + $0xb0] sm:$0xf]
    %v142 = vld [vmem:[#allocation5 + $0xb4] sm:$0xf]
    %v143 = vld [vmem:[#allocation5 + $0xb8] sm:$0xf]
    %v144 = vld [vmem:[#allocation5 + $0xbc] sm:$0xf]
    %v145 = vld [vmem:[#allocation5 + $0xc0] sm:$0xf]
    %v146 = vld [vmem:[#allocation5 + $0xc4] sm:$0xf]
    %v147 = vld [vmem:[#allocation5 + $0xc8] sm:$0xf]
    %v148 = vld [vmem:[#allocation5 + $0xcc] sm:$0xf]
    %v149 = vld [vmem:[#allocation5 + $0xd0] sm:$0xf]
    %v150 = vld [vmem:[#allocation5 + $0xd4] sm:$0xf]
    %v151 = vld [vmem:[#allocation5 + $0xd8] sm:$0xf]
    %v152 = vld [vmem:[#allocation5 + $0xdc] sm:$0xf]
    %v153 = vld [vmem:[#allocation5 + $0xe0] sm:$0xf]
    %v154 = vld [vmem:[#allocation5 + $0xe4] sm:$0xf]
    %v155 = vld [vmem:[#allocation5 + $0xe8] sm:$0xf]
    %v156 = vld [vmem:[#allocation5 + $0xec] sm:$0xf]
    %v157 = vld [vmem:[#allocation5 + $0xf0] sm:$0xf]
    %v158 = vld [vmem:[#allocation5 + $0xf4] sm:$0xf]
    %v159 = vld [vmem:[#allocation5 + $0xf8] sm:$0xf]
    %v160 = vld [vmem:[#allocation5 + $0xfc] sm:$0xf]
    %v161 = vld [vmem:[#allocation7] sm:$0xff]
    %v162 = vlaneseq
    %v163 = vshrl.u32 %v162, 7
    %v164 = vsub.s32 0, %v163
    %v165 = vrot.slane %v161, %v164
    %v230 = vunpack.c.l.b16 %v97
    %v231 = vunpack.c.l.b16 %v98
    %v232 = vunpack.c.l.b16 %v99
    %v233 = vunpack.c.l.b16 %v100
    %v234 = vunpack.c.l.b16 %v101
    %v235 = vunpack.c.l.b16 %v102
    %v236 = vunpack.c.l.b16 %v103
    %v237 = vunpack.c.l.b16 %v104
    %v238 = vunpack.c.l.b16 %v105
    %v239 = vunpack.c.l.b16 %v106
    %v240 = vunpack.c.l.b16 %v107
    %v241 = vunpack.c.l.b16 %v108
    %v242 = vunpack.c.l.b16 %v109
    %v243 = vunpack.c.l.b16 %v110
    %v244 = vunpack.c.l.b16 %v111
    %v245 = vunpack.c.l.b16 %v112
    %v246 = vunpack.c.l.b16 %v113
    %v247 = vunpack.c.l.b16 %v114
    %v248 = vunpack.c.l.b16 %v115
    %v249 = vunpack.c.l.b16 %v116
    %v250 = vunpack.c.l.b16 %v117
    %v251 = vunpack.c.l.b16 %v118
    %v252 = vunpack.c.l.b16 %v119
    %v253 = vunpack.c.l.b16 %v120
    %v254 = vunpack.c.l.b16 %v121
    %v255 = vunpack.c.l.b16 %v122
    %v256 = vunpack.c.l.b16 %v123
    %v257 = vunpack.c.l.b16 %v124
    %v258 = vunpack.c.l.b16 %v125
    %v259 = vunpack.c.l.b16 %v126
    %v260 = vunpack.c.l.b16 %v127
    %v261 = vunpack.c.l.b16 %v128
    %v262 = vunpack.c.l.b16 %v129
    %v263 = vunpack.c.l.b16 %v130
    %v264 = vunpack.c.l.b16 %v131
    %v265 = vunpack.c.l.b16 %v132
    %v266 = vunpack.c.l.b16 %v133
    %v267 = vunpack.c.l.b16 %v134
    %v268 = vunpack.c.l.b16 %v135
    %v269 = vunpack.c.l.b16 %v136
    %v270 = vunpack.c.l.b16 %v137
    %v271 = vunpack.c.l.b16 %v138
    %v272 = vunpack.c.l.b16 %v139
    %v273 = vunpack.c.l.b16 %v140
    %v274 = vunpack.c.l.b16 %v141
    %v275 = vunpack.c.l.b16 %v142
    %v276 = vunpack.c.l.b16 %v143
    %v277 = vunpack.c.l.b16 %v144
    %v278 = vunpack.c.l.b16 %v145
    %v279 = vunpack.c.l.b16 %v146
    %v280 = vunpack.c.l.b16 %v147
    %v281 = vunpack.c.l.b16 %v148
    %v282 = vunpack.c.l.b16 %v149
    %v283 = vunpack.c.l.b16 %v150
    %v284 = vunpack.c.l.b16 %v151
    %v285 = vunpack.c.l.b16 %v152
    %v286 = vunpack.c.l.b16 %v153
    %v287 = vunpack.c.l.b16 %v154
    %v288 = vunpack.c.l.b16 %v155
    %v289 = vunpack.c.l.b16 %v156
    %v290 = vunpack.c.l.b16 %v157
    %v291 = vunpack.c.l.b16 %v158
    %v292 = vunpack.c.l.b16 %v159
    %v293 = vunpack.c.l.b16 %v160
    %v294 = vpack.c.b16 %v231, %v230
    %v295 = vpack.c.b16 %v233, %v232
    %v296 = vpack.c.b16 %v235, %v234
    %v297 = vpack.c.b16 %v237, %v236
    %v298 = vpack.c.b16 %v239, %v238
    %v299 = vpack.c.b16 %v241, %v240
    %v300 = vpack.c.b16 %v243, %v242
    %v301 = vpack.c.b16 %v245, %v244
    %v302 = vpack.c.b16 %v247, %v246
    %v303 = vpack.c.b16 %v249, %v248
    %v304 = vpack.c.b16 %v251, %v250
    %v305 = vpack.c.b16 %v253, %v252
    %v306 = vpack.c.b16 %v255, %v254
    %v307 = vpack.c.b16 %v257, %v256
    %v308 = vpack.c.b16 %v259, %v258
    %v309 = vpack.c.b16 %v261, %v260
    %v310 = vpack.c.b16 %v263, %v262
    %v311 = vpack.c.b16 %v265, %v264
    %v312 = vpack.c.b16 %v267, %v266
    %v313 = vpack.c.b16 %v269, %v268
    %v314 = vpack.c.b16 %v271, %v270
    %v315 = vpack.c.b16 %v273, %v272
    %v316 = vpack.c.b16 %v275, %v274
    %v317 = vpack.c.b16 %v277, %v276
    %v318 = vpack.c.b16 %v279, %v278
    %v319 = vpack.c.b16 %v281, %v280
    %v320 = vpack.c.b16 %v283, %v282
    %v321 = vpack.c.b16 %v285, %v284
    %v322 = vpack.c.b16 %v287, %v286
    %v323 = vpack.c.b16 %v289, %v288
    %v324 = vpack.c.b16 %v291, %v290
    %v325 = vpack.c.b16 %v293, %v292
    %358 = vmatprep.subr.bf16.mxu0 0
    %359 = vmatpush1.bf16.msra.mxu0 %v294
    %360 = vmatprep.subr.bf16.mxu0 0
    %361 = vmatpush1.bf16.msra.mxu0 %v295
    %362 = vmatprep.subr.bf16.mxu0 0
    %363 = vmatpush1.bf16.msra.mxu0 %v296
    %364 = vmatprep.subr.bf16.mxu0 0
    %365 = vmatpush1.bf16.msra.mxu0 %v297
    %366 = vmatprep.subr.bf16.mxu0 0
    %367 = vmatpush1.bf16.msra.mxu0 %v298
    %368 = vmatprep.subr.bf16.mxu0 0
    %369 = vmatpush1.bf16.msra.mxu0 %v299
    %370 = vmatprep.subr.bf16.mxu0 0
    %371 = vmatpush1.bf16.msra.mxu0 %v300
    %372 = vmatprep.subr.bf16.mxu0 0
    %373 = vmatpush1.bf16.msra.mxu0 %v301
    %374 = vmatprep.subr.bf16.mxu0 0
    %375 = vmatpush1.bf16.msra.mxu0 %v302
    %376 = vmatprep.subr.bf16.mxu0 0
    %377 = vmatpush1.bf16.msra.mxu0 %v303
    %378 = vmatprep.subr.bf16.mxu0 0
    %379 = vmatpush1.bf16.msra.mxu0 %v304
    %380 = vmatprep.subr.bf16.mxu0 0
    %381 = vmatpush1.bf16.msra.mxu0 %v305
    %382 = vmatprep.subr.bf16.mxu0 0
    %383 = vmatpush1.bf16.msra.mxu0 %v306
    %384 = vmatprep.subr.bf16.mxu0 0
    %385 = vmatpush1.bf16.msra.mxu0 %v307
    %386 = vmatprep.subr.bf16.mxu0 0
    %387 = vmatpush1.bf16.msra.mxu0 %v308
    %388 = vmatprep.subr.bf16.mxu0 0
    %389 = vmatpush1.bf16.msra.mxu0 %v309
    %390 = vmatprep.mubr.bf16.mxu0 %v94
    %391 = vmatmul.mubr.bf16.gmra.mrb[0].mxu0 %v93
    %v392 = vpop.f32.mrb[0].mxu0
    %v393 = vadd.f32 %v165, %v392
    %v394 = vpop.f32.mrb[0].mxu0
    %v395 = vpop.f32.mrb[0].mxu0
    %v396 = vpop.f32.mrb[0].mxu0
    %397 = vdwg.mxu0
    %398 = vmatprep.subr.bf16.mxu0 0
    %399 = vmatpush1.bf16.msra.mxu0 %v310
    %400 = vmatprep.subr.bf16.mxu0 0
    %401 = vmatpush1.bf16.msra.mxu0 %v311
    %402 = vmatprep.subr.bf16.mxu0 0
    %403 = vmatpush1.bf16.msra.mxu0 %v312
    %404 = vmatprep.subr.bf16.mxu0 0
    %405 = vmatpush1.bf16.msra.mxu0 %v313
    %406 = vmatprep.subr.bf16.mxu0 0
    %407 = vmatpush1.bf16.msra.mxu0 %v314
    %408 = vmatprep.subr.bf16.mxu0 0
    %409 = vmatpush1.bf16.msra.mxu0 %v315
    %410 = vmatprep.subr.bf16.mxu0 0
    %411 = vmatpush1.bf16.msra.mxu0 %v316
    %412 = vmatprep.subr.bf16.mxu0 0
    %413 = vmatpush1.bf16.msra.mxu0 %v317
    %414 = vmatprep.subr.bf16.mxu0 0
    %415 = vmatpush1.bf16.msra.mxu0 %v318
    %416 = vmatprep.subr.bf16.mxu0 0
    %417 = vmatpush1.bf16.msra.mxu0 %v319
    %418 = vmatprep.subr.bf16.mxu0 0
    %419 = vmatpush1.bf16.msra.mxu0 %v320
    %420 = vmatprep.subr.bf16.mxu0 0
    %421 = vmatpush1.bf16.msra.mxu0 %v321
    %422 = vmatprep.subr.bf16.mxu0 0
    %423 = vmatpush1.bf16.msra.mxu0 %v322
    %424 = vmatprep.subr.bf16.mxu0 0
    %425 = vmatpush1.bf16.msra.mxu0 %v323
    %426 = vmatprep.subr.bf16.mxu0 0
    %427 = vmatpush1.bf16.msra.mxu0 %v324
    %428 = vmatprep.subr.bf16.mxu0 0
    %429 = vmatpush1.bf16.msra.mxu0 %v325
    %430 = vmatprep.mubr.bf16.mxu0 %v96
    %431 = vmatmul.mubr.bf16.gmra.mrb[0].mxu0 %v95
    %v432 = vpop.f32.mrb[0].mxu0
    %v433 = vadd.f32 %v393, %v432
    %v434 = vpop.f32.mrb[0].mxu0
    %v435 = vpop.f32.mrb[0].mxu0
    %v436 = vpop.f32.mrb[0].mxu0
    %437 = vdwg.mxu0
    %v438 = vxor.u32 %v433, 2147483648
    %v439 = vmul.f32 %v438, 1.442695
    %v440 = vpow.pop %v439
    %v441 = vadd.f32 %v440, 1.0
    %v442 = vrcp.pop %v441
    %v443 = vmul.f32 1.0, %v442
    %v444 = vmul.f32 %v433, %v443
    %v445 = vld [vmem:[#allocation8] sm:$0xf]
    %v446 = vld [vmem:[#allocation8 + $0x4] sm:$0xf]
    %v447 = vld [vmem:[#allocation8 + $0x8] sm:$0xf]
    %v448 = vld [vmem:[#allocation8 + $0xc] sm:$0xf]
    %v449 = vld [vmem:[#allocation8 + $0x10] sm:$0xf]
    %v450 = vld [vmem:[#allocation8 + $0x14] sm:$0xf]
    %v451 = vld [vmem:[#allocation8 + $0x18] sm:$0xf]
    %v452 = vld [vmem:[#allocation8 + $0x1c] sm:$0xf]
    %v453 = vld [vmem:[#allocation8 + $0x20] sm:$0xf]
    %v454 = vld [vmem:[#allocation8 + $0x24] sm:$0xf]
    %v455 = vld [vmem:[#allocation8 + $0x28] sm:$0xf]
    %v456 = vld [vmem:[#allocation8 + $0x2c] sm:$0xf]
    %v457 = vld [vmem:[#allocation8 + $0x30] sm:$0xf]
    %v458 = vld [vmem:[#allocation8 + $0x34] sm:$0xf]
    %v459 = vld [vmem:[#allocation8 + $0x38] sm:$0xf]
    %v460 = vld [vmem:[#allocation8 + $0x3c] sm:$0xf]
    %v461 = vpack.c.bf16 %v444, %v444
    %v478 = vunpack.c.l.b16 %v445
    %v479 = vunpack.c.l.b16 %v446
    %v480 = vunpack.c.l.b16 %v447
    %v481 = vunpack.c.l.b16 %v448
    %v482 = vunpack.c.l.b16 %v449
    %v483 = vunpack.c.l.b16 %v450
    %v484 = vunpack.c.l.b16 %v451
    %v485 = vunpack.c.l.b16 %v452
    %v486 = vunpack.c.l.b16 %v453
    %v487 = vunpack.c.l.b16 %v454
    %v488 = vunpack.c.l.b16 %v455
    %v489 = vunpack.c.l.b16 %v456
    %v490 = vunpack.c.l.b16 %v457
    %v491 = vunpack.c.l.b16 %v458
    %v492 = vunpack.c.l.b16 %v459
    %v493 = vunpack.c.l.b16 %v460
    %v494 = vpack.c.b16 %v479, %v478
    %v495 = vpack.c.b16 %v481, %v480
    %v496 = vpack.c.b16 %v483, %v482
    %v497 = vpack.c.b16 %v485, %v484
    %v498 = vpack.c.b16 %v487, %v486
    %v499 = vpack.c.b16 %v489, %v488
    %v500 = vpack.c.b16 %v491, %v490
    %v501 = vpack.c.b16 %v493, %v492
    %510 = vmatprep.subr.bf16.mxu0 0
    %511 = vmatpush1.bf16.msra.mxu0 %v494
    %512 = vmatprep.subr.bf16.mxu0 0
    %513 = vmatpush1.bf16.msra.mxu0 %v495
    %514 = vmatprep.subr.bf16.mxu0 0
    %515 = vmatpush1.bf16.msra.mxu0 %v496
    %516 = vmatprep.subr.bf16.mxu0 0
    %517 = vmatpush1.bf16.msra.mxu0 %v497
    %518 = vmatprep.subr.bf16.mxu0 0
    %519 = vmatpush1.bf16.msra.mxu0 %v498
    %520 = vmatprep.subr.bf16.mxu0 0
    %521 = vmatpush1.bf16.msra.mxu0 %v499
    %522 = vmatprep.subr.bf16.mxu0 0
    %523 = vmatpush1.bf16.msra.mxu0 %v500
    %524 = vmatprep.subr.bf16.mxu0 0
    %525 = vmatpush1.bf16.msra.mxu0 %v501
    %526 = vmatprep.subr.bf16.mxu0 0
    %527 = vmatpush1.bf16.msra.mxu0 0
    %528 = vmatprep.subr.bf16.mxu0 0
    %529 = vmatpush1.bf16.msra.mxu0 0
    %530 = vmatprep.subr.bf16.mxu0 0
    %531 = vmatpush1.bf16.msra.mxu0 0
    %532 = vmatprep.subr.bf16.mxu0 0
    %533 = vmatpush1.bf16.msra.mxu0 0
    %534 = vmatprep.subr.bf16.mxu0 0
    %535 = vmatpush1.bf16.msra.mxu0 0
    %536 = vmatprep.subr.bf16.mxu0 0
    %537 = vmatpush1.bf16.msra.mxu0 0
    %538 = vmatprep.subr.bf16.mxu0 0
    %539 = vmatpush1.bf16.msra.mxu0 0
    %540 = vmatprep.subr.bf16.mxu0 0
    %541 = vmatpush1.bf16.msra.mxu0 0
    %542 = vmatprep.mubr.bf16.mxu0 0
    %543 = vmatmul.mubr.bf16.gmra.mrb[0].mxu0 %v461
    %v544 = vpop.f32.mrb[0].mxu0
    %v545 = vadd.f32 0.0, %v544
    %v546 = vpop.f32.mrb[0].mxu0
    %v547 = vpop.f32.mrb[0].mxu0
    %v548 = vpop.f32.mrb[0].mxu0
    %549 = vdwg.mxu0
    %v550 = vsub.f32 %v444, %v545
    %v551 = vmul.f32 %v550, %v550
    %v552 = vpack.c.bf16 %v551, %v551
    %553 = vmatprep.subr.bf16.mxu0 0
    %554 = vmatpush1.bf16.msra.mxu0 %v494
    %555 = vmatprep.subr.bf16.mxu0 0
    %556 = vmatpush1.bf16.msra.mxu0 %v495
    %557 = vmatprep.subr.bf16.mxu0 0
    %558 = vmatpush1.bf16.msra.mxu0 %v496
    %559 = vmatprep.subr.bf16.mxu0 0
    %560 = vmatpush1.bf16.msra.mxu0 %v497
    %561 = vmatprep.subr.bf16.mxu0 0
    %562 = vmatpush1.bf16.msra.mxu0 %v498
    %563 = vmatprep.subr.bf16.mxu0 0
    %564 = vmatpush1.bf16.msra.mxu0 %v499
    %565 = vmatprep.subr.bf16.mxu0 0
    %566 = vmatpush1.bf16.msra.mxu0 %v500
    %567 = vmatprep.subr.bf16.mxu0 0
    %568 = vmatpush1.bf16.msra.mxu0 %v501
    %569 = vmatprep.subr.bf16.mxu0 0
    %570 = vmatpush1.bf16.msra.mxu0 0
    %571 = vmatprep.subr.bf16.mxu0 0
    %572 = vmatpush1.bf16.msra.mxu0 0
    %573 = vmatprep.subr.bf16.mxu0 0
    %574 = vmatpush1.bf16.msra.mxu0 0
    %575 = vmatprep.subr.bf16.mxu0 0
    %576 = vmatpush1.bf16.msra.mxu0 0
    %577 = vmatprep.subr.bf16.mxu0 0
    %578 = vmatpush1.bf16.msra.mxu0 0
    %579 = vmatprep.subr.bf16.mxu0 0
    %580 = vmatpush1.bf16.msra.mxu0 0
    %581 = vmatprep.subr.bf16.mxu0 0
    %582 = vmatpush1.bf16.msra.mxu0 0
    %583 = vmatprep.subr.bf16.mxu0 0
    %584 = vmatpush1.bf16.msra.mxu0 0
    %585 = vmatprep.mubr.bf16.mxu0 0
    %586 = vmatmul.mubr.bf16.gmra.mrb[0].mxu0 %v552
    %v587 = vpop.f32.mrb[0].mxu0
    %v588 = vadd.f32 1e-12, %v587
    %v589 = vpop.f32.mrb[0].mxu0
    %v590 = vpop.f32.mrb[0].mxu0
    %v591 = vpop.f32.mrb[0].mxu0
    %592 = vdwg.mxu0
    %v593 = vrsqrt.pop %v588
    %v594 = vmul.f32 %v550, %v593
    %v595 = vlaneseq
    %v596 = vshrl.u32 %v595, 7
    %v597 = vsub.s32 1, %v596
    %v598 = vrot.slane %v161, %v597
    %v599 = vmul.f32 %v594, %v598
    %v600 = vlaneseq
    %v601 = vshrl.u32 %v600, 7
    %v602 = vsub.s32 2, %v601
    %v603 = vrot.slane %v161, %v602
    %v604 = vadd.f32 %v599, %v603
    %605 = vst [vmem:[#allocation10] sm:$0x3] %v604
    // Predicated region
    $region34: #{tpu_custom_call.1} parent=1 // pred_check
      _
    $region35: #{tpu_custom_call.1} parent=1 // pred_check_branch
      %607 = sbr.rel (0) target = $region37
    $region36: #{tpu_custom_call.1} parent=1 // pred_region
      %s609 = ssub.s32 32, 32
      %610 = vsyncadd [#allocation4], %s609
      %s612 = sshll.u32 [#allocation10], 4
      %s613 = int_to_ptr.vmem [resolvable:$true] %s612
      %615 = dma.vmem_to_hbm [thread:$0]  %s613, 32, %s4, [#allocation4]
    $region37: #{tpu_custom_call.1} parent=1 // pred_fallthru
      _
    // Predicated region
    $region38: #{tpu_custom_call.1} parent=1 // pred_check
      _
    $region39: #{tpu_custom_call.1} parent=1 // pred_check_branch
      %617 = sbr.rel (0) target = $region41
    $region40: #{tpu_custom_call.1} parent=1 // pred_region
      %618 = dma.done [#allocation4], 32
    $region41: #{tpu_custom_call.1} parent=1 // pred_fallthru
      _
    %619 = vsyncpa [#allocation3], 1
    %620 = vsyncpa [#allocation6], 1
    %621 = vsyncpa [#allocation9], 1
    %622 = vsyncpa [#allocation4], 1

</llo_original>
